<compile_context>
chip_gen: v7x
topology: tpu7x:2x2x1
jax: 0.10.0
libtpu: 0.0.40
codegen_flags: <defaults>
</compile_context>

<pallas_src>
import jax
import jax.numpy as jnp
from jax.experimental import pallas as pl
from jax.experimental.pallas import tpu as pltpu


def _round_up(x, m):
    return ((x + m - 1) // m) * m


# ----------------------------------------------------------------------------
# Kernel factory.  refs = (x, W_0..W_{L-1}, b_0..b_{L-1}, out).
# The activation lives in vregs across layers (no VMEM scratch).  The layer
# loop is a static Python unroll: L is small and the per-layer shapes are
# heterogeneous, which precludes dynamic first-axis ref indexing.
# ----------------------------------------------------------------------------
def _make_fused_mlp_kernel(n_layers, compute_dtype):
    def kernel(*refs):
        x_ref = refs[0]
        w_refs = refs[1:1 + n_layers]
        b_refs = refs[1 + n_layers:1 + 2 * n_layers]
        o_ref = refs[-1]

        h = x_ref[...]
        for l in range(n_layers):
            h = jnp.dot(h.astype(compute_dtype), w_refs[l][...],
                        preferred_element_type=jnp.float32)
            h = h + b_refs[l][...]            # bias add in f32
        o_ref[...] = h.astype(o_ref.dtype)

    return kernel


# ----------------------------------------------------------------------------
# Parameter construction (deterministic, mirrors BitwiseMLP.__init__ shapes)
# ----------------------------------------------------------------------------
def init_bitwise_mlp_params(key, in_size, out_size, fc_sizes):
    sizes = list(fc_sizes) + [out_size]
    params = {"weights": [], "biases": [], "bn": []}
    isize = in_size
    for i, osize in enumerate(sizes):
        key, kw, kb, kg, kbt, km, kv = jax.random.split(key, 7)
        bound = 1.0 / jnp.sqrt(isize)
        W = jax.random.uniform(kw, (osize, isize), jnp.float32, -bound, bound)
        b = jax.random.uniform(kb, (osize,), jnp.float32, -bound, bound)
        params["weights"].append(W)
        params["biases"].append(b)
        if i < len(sizes) - 1:
            gamma = 1.0 + 0.1 * jax.random.normal(kg, (osize,), jnp.float32)
            beta = 0.1 * jax.random.normal(kbt, (osize,), jnp.float32)
            run_mean = 0.1 * jax.random.normal(km, (osize,), jnp.float32)
            run_var = jnp.abs(1.0 + 0.1 * jax.random.normal(kv, (osize,),
                                                            jnp.float32))
            params["bn"].append((gamma, beta, run_mean, run_var))
        isize = osize
    key, kg = jax.random.split(key)
    # ScaleLayer(out_size): per-channel multiplicative scale
    params["out_scale"] = 1.0 + 0.1 * jax.random.normal(kg, (out_size,),
                                                        jnp.float32)
    return params


# ----------------------------------------------------------------------------
# One-time preparation (call once per parameter set, reuse across forwards):
# fold BN / ScaleLayer into the weights + bias and pad each layer to its own
# lane-dense output width.
#   hidden layer i: y = gamma*((x@W.T + b) - rm)/sqrt(rv+eps) + beta
#                     = x @ (W.T * s) + (b*s + t),  s = gamma/sqrt(rv+eps),
#                                                   t = beta - rm*s
#   last layer:     y = (x@W.T + b) * out_scale
# Weights are stored in `compute_dtype` (bf16 default -> native MXU rate and
# half the DMA/VMEM bytes); biases stay f32 and are added after accumulation.
# ----------------------------------------------------------------------------
def prepare_fused_params(params, *, eps=1e-5, compute_dtype=jnp.bfloat16):
    n_layers = len(params["weights"])
    in_size = params["weights"][0].shape[1]
    Ws, Bs = [], []
    prev_w = in_size                       # first layer contracts over raw Fin
    for i in range(n_layers):
        W = params["weights"][i]           # (Fout, Fin), PyTorch layout
        b = params["biases"][i]
        Fout, Fin = W.shape
        if i < n_layers - 1:
            gamma, beta, rm, rv = params["bn"][i]
            s = gamma / jnp.sqrt(rv + eps)
            t = beta - rm * s
        else:
            s = params["out_scale"]
            t = jnp.zeros_like(s)
        Wt = W.T * s[None, :]              # (Fin, Fout), affine folded in
        bf = b * s + t                     # (Fout,)
        p_out = _round_up(Fout, 128)
        Wp = jnp.zeros((prev_w, p_out), jnp.float32).at[:Fin, :Fout].set(Wt)
        bp = jnp.zeros((1, p_out), jnp.float32).at[0, :Fout].set(bf)
        Ws.append(Wp.astype(compute_dtype))
        Bs.append(bp)                      # biases stay f32
        prev_w = p_out
    return {
        "weights": Ws,                     # list of (prev_w, round_up(Fout,128))
        "biases": Bs,                      # list of (1, round_up(Fout,128)) f32
        "in_size": in_size,
        "out_size": params["weights"][-1].shape[0],
    }


# ----------------------------------------------------------------------------
# Forward pass: one fused pallas_call over a batch grid.
# ----------------------------------------------------------------------------
def bitwise_mlp_forward(x, fused, *, block_b=512, out_dtype=None):
    Bsz, Fin = x.shape
    assert Fin == fused["in_size"]
    n_layers = len(fused["weights"])
    p_out = fused["weights"][-1].shape[1]
    compute_dtype = fused["weights"][0].dtype
    out_dtype = x.dtype if out_dtype is None else out_dtype

    # --- batch tiling --------------------------------------------------------
    Bp0 = _round_up(Bsz, 8)
    bb = min(_round_up(block_b, 8), Bp0)
    # For sizeable batches guarantee >= 2 grid blocks so the "parallel" axis
    # actually shards across v7x's two TensorCores (and keeps pad waste small).
    if Bp0 >= 512 and Bp0 // bb < 2:
        bb = _round_up(pl.cdiv(Bp0, 2), 8)
    Bp = _round_up(Bsz, bb)
    if Bp != Bsz:                          # pad rows only when necessary
        x = jnp.pad(x, ((0, Bp - Bsz), (0, 0)))
    grid = (Bp // bb,)

    # --- compiler params (raise scoped VMEM only if we approach v5e's 16 MiB)
    w_bytes = sum(int(w.size) * w.dtype.itemsize for w in fused["weights"])
    b_bytes = sum(int(b.size) * b.dtype.itemsize for b in fused["biases"])
    act_bytes = bb * (Fin * x.dtype.itemsize
                      + p_out * jnp.dtype(out_dtype).itemsize)
    est = 2 * (w_bytes + b_bytes + act_bytes)   # conservative: 2x-buffered
    compiler_kwargs = dict(dimension_semantics=("parallel",))
    if est > 12 * 1024 * 1024:
        compiler_kwargs["vmem_limit_bytes"] = min(int(est * 1.25),
                                                  96 * 1024 * 1024)

    # --- specs ---------------------------------------------------------------
    # x block: last dim equals the full array dim (no column padding needed),
    # second-to-last is a multiple of 8.
    in_specs = [pl.BlockSpec((bb, Fin), lambda i: (i, 0))]
    for w in fused["weights"]:             # whole (small) weight, constant idx
        in_specs.append(pl.BlockSpec(w.shape, lambda i: (0, 0)))
    for b in fused["biases"]:
        in_specs.append(pl.BlockSpec(b.shape, lambda i: (0, 0)))

    kernel = _make_fused_mlp_kernel(n_layers, compute_dtype)
    out = pl.pallas_call(
        kernel,
        out_shape=jax.ShapeDtypeStruct((Bp, p_out), out_dtype),
        grid=grid,
        in_specs=in_specs,
        out_specs=pl.BlockSpec((bb, p_out), lambda i: (i, 0)),
        compiler_params=pltpu.CompilerParams(**compiler_kwargs),
    )(x, *fused["weights"], *fused["biases"])

    return out[:Bsz, :fused["out_size"]]


# ----------------------------------------------------------------------------
# Pure-JAX reference (eval-mode BN, dropout=0)
# ----------------------------------------------------------------------------
def bitwise_mlp_reference(x, params):
    eps = 1e-5
    n_layers = len(params["weights"])
    h = x
    for i in range(n_layers):
        h = h @ params["weights"][i].T + params["biases"][i]
        if i < n_layers - 1:
            gamma, beta, rm, rv = params["bn"][i]
            h = gamma * (h - rm) / jnp.sqrt(rv + eps) + beta
    return h * params["out_scale"]


# ----------------------------------------------------------------------------
if __name__ == "__main__":
    in_size, out_size = 16, 8
    fc_sizes = [32, 24]
    batch = 8

    key = jax.random.PRNGKey(0)
    key, kx = jax.random.split(key)
    x = jax.random.normal(kx, (batch, in_size), jnp.float32)
    params = init_bitwise_mlp_params(key, in_size, out_size, fc_sizes)
    ref = bitwise_mlp_reference(x, params)

    # Exact f32-operand path (tight tolerance vs. reference).
    fused_f32 = prepare_fused_params(params, compute_dtype=jnp.float32)
    out_f32 = jax.block_until_ready(bitwise_mlp_forward(x, fused_f32))
    assert out_f32.shape == (batch, out_size)
    assert jnp.allclose(out_f32, ref, atol=1e-4, rtol=1e-4), \
        "f32 kernel mismatch vs reference"

    # bf16-operand fast path (native MXU rate, half weight DMA/VMEM); looser
    # tolerance accounts for bf16 quantization of the folded weights/activations.
    fused_bf16 = prepare_fused_params(params, compute_dtype=jnp.bfloat16)
    out_bf16 = jax.block_until_ready(bitwise_mlp_forward(x, fused_bf16))
    assert out_bf16.shape == (batch, out_size)
    assert jnp.allclose(out_bf16, ref, atol=5e-2, rtol=5e-2), \
        "bf16 kernel mismatch vs reference"

    print("KERNEL_OK")
</pallas_src>

<mosaic_0001>
module attributes {stable_mosaic.version = 11 : i64} {
  func.func @kernel(%arg0: i32, %arg1: memref<8x16xf32, #tpu.memory_space<vmem>>, %arg2: memref<16x128xf32, #tpu.memory_space<vmem>>, %arg3: memref<128x128xf32, #tpu.memory_space<vmem>>, %arg4: memref<128x128xf32, #tpu.memory_space<vmem>>, %arg5: memref<1x128xf32, #tpu.memory_space<vmem>>, %arg6: memref<1x128xf32, #tpu.memory_space<vmem>>, %arg7: memref<1x128xf32, #tpu.memory_space<vmem>>, %arg8: memref<8x128xf32, #tpu.memory_space<vmem>>) attributes {dimension_semantics = [#tpu.dimension_semantics<parallel>], iteration_bounds = array<i64: 1>, scalar_prefetch = 0 : i64, scratch_operands = 0 : i64, tpu.core_type = #tpu.core_type<tc>, window_params = [{transform_indices = @transform_0, window_bounds = array<i64: 8, 16>}, {pipeline_mode = #tpu.pipeline_mode<synchronous>, transform_indices = @transform_1, window_bounds = array<i64: 16, 128>}, {pipeline_mode = #tpu.pipeline_mode<synchronous>, transform_indices = @transform_2, window_bounds = array<i64: 128, 128>}, {pipeline_mode = #tpu.pipeline_mode<synchronous>, transform_indices = @transform_3, window_bounds = array<i64: 128, 128>}, {pipeline_mode = #tpu.pipeline_mode<synchronous>, transform_indices = @transform_4, window_bounds = array<i64: 1, 128>}, {pipeline_mode = #tpu.pipeline_mode<synchronous>, transform_indices = @transform_5, window_bounds = array<i64: 1, 128>}, {pipeline_mode = #tpu.pipeline_mode<synchronous>, transform_indices = @transform_6, window_bounds = array<i64: 1, 128>}, {transform_indices = @transform_7, window_bounds = array<i64: 8, 128>}]} {
    %c0 = arith.constant 0 : index
    %c0_0 = arith.constant 0 : index
    %0 = vector.load %arg1[%c0, %c0_0] : memref<8x16xf32, #tpu.memory_space<vmem>>, vector<8x16xf32>
    %c0_1 = arith.constant 0 : index
    %c0_2 = arith.constant 0 : index
    %1 = vector.load %arg2[%c0_1, %c0_2] : memref<16x128xf32, #tpu.memory_space<vmem>>, vector<16x128xf32>
    %cst = arith.constant dense<0.000000e+00> : vector<8x128xf32>
    %2 = tpu.matmul %0, %1, %cst {dimension_numbers = #tpu.dot_dimension_numbers<[1], [0], [0], [1], [0, 0, 1, 1], [], []>} : vector<8x16xf32>, vector<16x128xf32>, vector<8x128xf32> -> vector<8x128xf32>
    %c0_3 = arith.constant 0 : index
    %c0_4 = arith.constant 0 : index
    %3 = vector.load %arg5[%c0_3, %c0_4] : memref<1x128xf32, #tpu.memory_space<vmem>>, vector<1x128xf32>
    %4 = vector.broadcast %3 : vector<1x128xf32> to vector<8x128xf32>
    %5 = arith.addf %2, %4 : vector<8x128xf32>
    %c0_5 = arith.constant 0 : index
    %c0_6 = arith.constant 0 : index
    %6 = vector.load %arg3[%c0_5, %c0_6] : memref<128x128xf32, #tpu.memory_space<vmem>>, vector<128x128xf32>
    %cst_7 = arith.constant dense<0.000000e+00> : vector<8x128xf32>
    %7 = tpu.matmul %5, %6, %cst_7 {dimension_numbers = #tpu.dot_dimension_numbers<[1], [0], [0], [1], [0, 0, 1, 1], [], []>} : vector<8x128xf32>, vector<128x128xf32>, vector<8x128xf32> -> vector<8x128xf32>
    %c0_8 = arith.constant 0 : index
    %c0_9 = arith.constant 0 : index
    %8 = vector.load %arg6[%c0_8, %c0_9] : memref<1x128xf32, #tpu.memory_space<vmem>>, vector<1x128xf32>
    %9 = vector.broadcast %8 : vector<1x128xf32> to vector<8x128xf32>
    %10 = arith.addf %7, %9 : vector<8x128xf32>
    %c0_10 = arith.constant 0 : index
    %c0_11 = arith.constant 0 : index
    %11 = vector.load %arg4[%c0_10, %c0_11] : memref<128x128xf32, #tpu.memory_space<vmem>>, vector<128x128xf32>
    %cst_12 = arith.constant dense<0.000000e+00> : vector<8x128xf32>
    %12 = tpu.matmul %10, %11, %cst_12 {dimension_numbers = #tpu.dot_dimension_numbers<[1], [0], [0], [1], [0, 0, 1, 1], [], []>} : vector<8x128xf32>, vector<128x128xf32>, vector<8x128xf32> -> vector<8x128xf32>
    %c0_13 = arith.constant 0 : index
    %c0_14 = arith.constant 0 : index
    %13 = vector.load %arg7[%c0_13, %c0_14] : memref<1x128xf32, #tpu.memory_space<vmem>>, vector<1x128xf32>
    %14 = vector.broadcast %13 : vector<1x128xf32> to vector<8x128xf32>
    %15 = arith.addf %12, %14 : vector<8x128xf32>
    %c0_15 = arith.constant 0 : index
    %c0_16 = arith.constant 0 : index
    %16 = vector.load %arg8[%c0_15, %c0_16] : memref<8x128xf32, #tpu.memory_space<vmem>>, vector<8x128xf32>
    tpu.vector_store %arg8[%c0_15, %c0_16], %15 {strides = array<i32>} : memref<8x128xf32, #tpu.memory_space<vmem>>, vector<8x128xf32>,
    return
  }
  func.func @transform_0(%arg0: i32) -> (i32, i32) {
    %c0_i32 = arith.constant 0 : i32
    %c0_i32_0 = arith.constant 0 : i32
    return %arg0, %c0_i32 : i32, i32
  }
  func.func @transform_1(%arg0: i32) -> (i32, i32) {
    %c0_i32 = arith.constant 0 : i32
    %c0_i32_0 = arith.constant 0 : i32
    %c0_i32_1 = arith.constant 0 : i32
    return %c0_i32, %c0_i32_0 : i32, i32
  }
  func.func @transform_2(%arg0: i32) -> (i32, i32) {
    %c0_i32 = arith.constant 0 : i32
    %c0_i32_0 = arith.constant 0 : i32
    %c0_i32_1 = arith.constant 0 : i32
    return %c0_i32, %c0_i32_0 : i32, i32
  }
  func.func @transform_3(%arg0: i32) -> (i32, i32) {
    %c0_i32 = arith.constant 0 : i32
    %c0_i32_0 = arith.constant 0 : i32
    %c0_i32_1 = arith.constant 0 : i32
    return %c0_i32, %c0_i32_0 : i32, i32
  }
  func.func @transform_4(%arg0: i32) -> (i32, i32) {
    %c0_i32 = arith.constant 0 : i32
    %c0_i32_0 = arith.constant 0 : i32
    %c0_i32_1 = arith.constant 0 : i32
    return %c0_i32, %c0_i32_0 : i32, i32
  }
  func.func @transform_5(%arg0: i32) -> (i32, i32) {
    %c0_i32 = arith.constant 0 : i32
    %c0_i32_0 = arith.constant 0 : i32
    %c0_i32_1 = arith.constant 0 : i32
    return %c0_i32, %c0_i32_0 : i32, i32
  }
  func.func @transform_6(%arg0: i32) -> (i32, i32) {
    %c0_i32 = arith.constant 0 : i32
    %c0_i32_0 = arith.constant 0 : i32
    %c0_i32_1 = arith.constant 0 : i32
    return %c0_i32, %c0_i32_0 : i32, i32
  }
  func.func @transform_7(%arg0: i32) -> (i32, i32) {
    %c0_i32 = arith.constant 0 : i32
    %c0_i32_0 = arith.constant 0 : i32
    return %arg0, %c0_i32 : i32, i32
  }
}

</mosaic_0001>

<llo_original>
// kernel: tpu_custom_call.1
$region0: #{tpu_custom_call.1}
  #allocation0 [shape = 'u32[]', space=smem, size = 0x4, offset = 0x4, fixed_abs, tag = 'smem constant byte address 0x4 - core index']
  #allocation1 [shape = 'u32[144,128]{1,0:T(1,128)}', space=vmem, size = 0x12000, scoped, tag = 'internal scratch']
  %s0 = inlined_call_operand.hbm [shape: f32[8,16], index: 0, kind: input, shape index: {}]
  %s1 = inlined_call_operand.hbm [shape: f32[16,128], index: 1, kind: input, shape index: {}]
  %s2 = inlined_call_operand.hbm [shape: f32[128,128], index: 2, kind: input, shape index: {}]
  %s3 = inlined_call_operand.hbm [shape: f32[128,128], index: 3, kind: input, shape index: {}]
  %s4 = inlined_call_operand.vmem [shape: f32[1,128], index: 4, kind: input, shape index: {}]
  %s5 = inlined_call_operand.vmem [shape: f32[1,128], index: 5, kind: input, shape index: {}]
  %s6 = inlined_call_operand.vmem [shape: f32[1,128], index: 6, kind: input, shape index: {}]
  %s7 = inlined_call_operand.hbm [shape: f32[8,128], index: 7, kind: output, shape index: {}]
  %s8 = sld [smem:[#allocation0]]
  $region54: #{tpu_custom_call.1} parent=0
    _
  %s10 = ssub.s32 1, %s8
  %s11 = scalar_select 0, %s10, %s8
  $region1: #{tpu_custom_call.1} parent=0
    #allocation2 [shape = 'u8[4096]{0}', space=vmem, size = 0x1000, scoped, tag = 'input window, operand 0, single buffered']
    #allocation3 [shape = 's32[1]{0}', space=sflag, size = 0x4, scoped, tag = 'scoped memory for tpu_custom_call.1']
    #allocation4 [shape = 's32[1]{0}', space=sflag, size = 0x4, scoped, tag = 'scoped memory for tpu_custom_call.1']
    #allocation5 [shape = 'u8[8192]{0}', space=vmem, size = 0x2000, scoped, tag = 'input window, operand 1, single buffered']
    #allocation6 [shape = 's32[1]{0}', space=sflag, size = 0x4, scoped, tag = 'scoped memory for tpu_custom_call.1']
    #allocation7 [shape = 'u8[65536]{0}', space=vmem, size = 0x10000, scoped, tag = 'input window, operand 2, single buffered']
    #allocation8 [shape = 'u8[65536]{0}', space=vmem, size = 0x10000, scoped, tag = 'input window, operand 3, single buffered']
    #allocation9 [shape = 's32[1]{0}', space=sflag, size = 0x4, scoped, tag = 'scoped memory for tpu_custom_call.1']
    #allocation10 [shape = 'u8[4096]{0}', space=vmem, size = 0x1000, scoped, tag = 'output window, operand 0, single buffered']
    %12 = vsyncpa [#allocation3], 0
    %13 = vsyncpa [#allocation6], 0
    %14 = vsyncpa [#allocation9], 0
    %15 = vsyncpa [#allocation4], 0
    // Predicated region
    $region2: #{tpu_custom_call.1} parent=1 // pred_check
      _
    $region3: #{tpu_custom_call.1} parent=1 // pred_check_branch
      %17 = sbr.rel (0) target = $region5
    $region4: #{tpu_custom_call.1} parent=1 // pred_region
      %s19 = ssub.s32 128, 128
      %20 = vsyncadd [#allocation3], %s19
      %s22 = sshll.u32 [#allocation2], 4
      %s23 = int_to_ptr.vmem [resolvable:$true] %s22
      %25 = dma.hbm_to_vmem [thread:$0]  %s0, 128, %s23, [#allocation3]
    $region5: #{tpu_custom_call.1} parent=1 // pred_fallthru
      _
    // Predicated region
    $region6: #{tpu_custom_call.1} parent=1 // pred_check
      _
    $region7: #{tpu_custom_call.1} parent=1 // pred_check_branch
      %27 = sbr.rel (0) target = $region9
    $region8: #{tpu_custom_call.1} parent=1 // pred_region
      %s29 = ssub.s32 256, 256
      %30 = vsyncadd [#allocation6], %s29
      %s31 = sshll.u32 [#allocation5], 4
      %s32 = int_to_ptr.vmem [resolvable:$true] %s31
      %37 = dma.hbm_to_vmem [thread:$0]  %s1, 256, %s32, [#allocation6], 128, 128, 8
    $region9: #{tpu_custom_call.1} parent=1 // pred_fallthru
      _
    // Predicated region
    $region10: #{tpu_custom_call.1} parent=1 // pred_check
      _
    $region11: #{tpu_custom_call.1} parent=1 // pred_check_branch
      %39 = sbr.rel (0) target = $region13
    $region12: #{tpu_custom_call.1} parent=1 // pred_region
      %s41 = ssub.s32 2048, 2048
      %42 = vsyncadd [#allocation6], %s41
      %s43 = sshll.u32 [#allocation7], 4
      %s44 = int_to_ptr.vmem [resolvable:$true] %s43
      %49 = dma.hbm_to_vmem [thread:$0]  %s2, 2048, %s44, [#allocation6], 128, 128, 8
    $region13: #{tpu_custom_call.1} parent=1 // pred_fallthru
      _
    // Predicated region
    $region14: #{tpu_custom_call.1} parent=1 // pred_check
      _
    $region15: #{tpu_custom_call.1} parent=1 // pred_check_branch
      %51 = sbr.rel (0) target = $region17
    $region16: #{tpu_custom_call.1} parent=1 // pred_region
      %s53 = ssub.s32 2048, 2048
      %54 = vsyncadd [#allocation9], %s53
      %s55 = sshll.u32 [#allocation8], 4
      %s56 = int_to_ptr.vmem [resolvable:$true] %s55
      %61 = dma.hbm_to_vmem [thread:$0]  %s3, 2048, %s56, [#allocation9], 128, 128, 8
    $region17: #{tpu_custom_call.1} parent=1 // pred_fallthru
      _
    // Predicated region
    $region18: #{tpu_custom_call.1} parent=1 // pred_check
      _
    $region19: #{tpu_custom_call.1} parent=1 // pred_check_branch
      %63 = sbr.rel (0) target = $region21
    $region20: #{tpu_custom_call.1} parent=1 // pred_region
      _
    $region21: #{tpu_custom_call.1} parent=1 // pred_fallthru
      _
    // Predicated region
    $region22: #{tpu_custom_call.1} parent=1 // pred_check
      _
    $region23: #{tpu_custom_call.1} parent=1 // pred_check_branch
      %65 = sbr.rel (0) target = $region25
    $region24: #{tpu_custom_call.1} parent=1 // pred_region
      _
    $region25: #{tpu_custom_call.1} parent=1 // pred_fallthru
      _
    // Predicated region
    $region26: #{tpu_custom_call.1} parent=1 // pred_check
      _
    $region27: #{tpu_custom_call.1} parent=1 // pred_check_branch
      %67 = sbr.rel (0) target = $region29
    $region28: #{tpu_custom_call.1} parent=1 // pred_region
      _
    $region29: #{tpu_custom_call.1} parent=1 // pred_fallthru
      _
    // Predicated region
    $region30: #{tpu_custom_call.1} parent=1 // pred_check
      _
    $region31: #{tpu_custom_call.1} parent=1 // pred_check_branch
      %69 = sbr.rel (0) target = $region33
    $region32: #{tpu_custom_call.1} parent=1 // pred_region
      %70 = dma.done [#allocation3], 128
    $region33: #{tpu_custom_call.1} parent=1 // pred_fallthru
      _
    // Predicated region
    $region34: #{tpu_custom_call.1} parent=1 // pred_check
      _
    $region35: #{tpu_custom_call.1} parent=1 // pred_check_branch
      %72 = sbr.rel (0) target = $region37
    $region36: #{tpu_custom_call.1} parent=1 // pred_region
      %73 = dma.done [#allocation6], 256
    $region37: #{tpu_custom_call.1} parent=1 // pred_fallthru
      _
    // Predicated region
    $region38: #{tpu_custom_call.1} parent=1 // pred_check
      _
    $region39: #{tpu_custom_call.1} parent=1 // pred_check_branch
      %75 = sbr.rel (0) target = $region41
    $region40: #{tpu_custom_call.1} parent=1 // pred_region
      %76 = dma.done [#allocation6], 2048
    $region41: #{tpu_custom_call.1} parent=1 // pred_fallthru
      _
    // Predicated region
    $region42: #{tpu_custom_call.1} parent=1 // pred_check
      _
    $region43: #{tpu_custom_call.1} parent=1 // pred_check_branch
      %78 = sbr.rel (0) target = $region45
    $region44: #{tpu_custom_call.1} parent=1 // pred_region
      %79 = dma.done [#allocation9], 2048
    $region45: #{tpu_custom_call.1} parent=1 // pred_fallthru
      _
    %v80 = vld [vmem:[#allocation2] sm:$0xff]
    %v81 = vld [vmem:[#allocation5] sm:$0xff]
    %v82 = vld [vmem:[#allocation5 + $0x8] sm:$0xff]
    %v83 = vld [vmem:[%s4] sm:$0x1]
    %v85 = vlaneseq
    %v86 = vshrl.u32 %v85, 7
    %v87 = vsub.s32 0, %v86
    %v88 = vrot.slane %v83, %v87
    %vm90 = vcmask 130048
    %v92 = vsel %vm90, %v80, 0
    %94 = vmatprep.subr.mxu0 0.0
    %95 = vmatpush1.msra.mxu0 %v81
    %96 = vmatprep.subr.mxu0 0.0
    %97 = vmatpush1.msra.mxu0 %v82
    %98 = vmatprep.subr.mxu0 0.0
    %99 = vmatpush1.msra.mxu0 0.0
    %100 = vmatprep.subr.mxu0 0.0
    %101 = vmatpush1.msra.mxu0 0.0
    %102 = vmatprep.subr.mxu0 0.0
    %103 = vmatpush1.msra.mxu0 0.0
    %104 = vmatprep.subr.mxu0 0.0
    %105 = vmatpush1.msra.mxu0 0.0
    %106 = vmatprep.subr.mxu0 0.0
    %107 = vmatpush1.msra.mxu0 0.0
    %108 = vmatprep.subr.mxu0 0.0
    %109 = vmatpush1.msra.mxu0 0.0
    %110 = vmatprep.subr.mxu0 0.0
    %111 = vmatpush1.msra.mxu0 0.0
    %112 = vmatprep.subr.mxu0 0.0
    %113 = vmatpush1.msra.mxu0 0.0
    %114 = vmatprep.subr.mxu0 0.0
    %115 = vmatpush1.msra.mxu0 0.0
    %116 = vmatprep.subr.mxu0 0.0
    %117 = vmatpush1.msra.mxu0 0.0
    %118 = vmatprep.subr.mxu0 0.0
    %119 = vmatpush1.msra.mxu0 0.0
    %120 = vmatprep.subr.mxu0 0.0
    %121 = vmatpush1.msra.mxu0 0.0
    %122 = vmatprep.subr.mxu0 0.0
    %123 = vmatpush1.msra.mxu0 0.0
    %124 = vmatprep.subr.mxu0 0.0
    %125 = vmatpush1.msra.mxu0 0.0
    %126 = vmatprep.subr.mxu0 0.0
    %127 = vmatpush1.msra.mxu0 0.0
    %128 = vmatprep.subr.mxu0 0.0
    %129 = vmatpush1.msra.mxu0 0.0
    %130 = vmatprep.subr.mxu0 0.0
    %131 = vmatpush1.msra.mxu0 0.0
    %132 = vmatprep.subr.mxu0 0.0
    %133 = vmatpush1.msra.mxu0 0.0
    %134 = vmatprep.subr.mxu0 0.0
    %135 = vmatpush1.msra.mxu0 0.0
    %136 = vmatprep.subr.mxu0 0.0
    %137 = vmatpush1.msra.mxu0 0.0
    %138 = vmatprep.subr.mxu0 0.0
    %139 = vmatpush1.msra.mxu0 0.0
    %140 = vmatprep.subr.mxu0 0.0
    %141 = vmatpush1.msra.mxu0 0.0
    %142 = vmatprep.subr.mxu0 0.0
    %143 = vmatpush1.msra.mxu0 0.0
    %144 = vmatprep.subr.mxu0 0.0
    %145 = vmatpush1.msra.mxu0 0.0
    %146 = vmatprep.subr.mxu0 0.0
    %147 = vmatpush1.msra.mxu0 0.0
    %148 = vmatprep.subr.mxu0 0.0
    %149 = vmatpush1.msra.mxu0 0.0
    %150 = vmatprep.subr.mxu0 0.0
    %151 = vmatpush1.msra.mxu0 0.0
    %152 = vmatprep.subr.mxu0 0.0
    %153 = vmatpush1.msra.mxu0 0.0
    %154 = vmatprep.subr.mxu0 0.0
    %155 = vmatpush1.msra.mxu0 0.0
    %156 = vmatprep.subr.mxu0 0.0
    %157 = vmatpush1.msra.mxu0 0.0
    %158 = vmatprep.mubr.f32.mxu0 0.0
    %159 = vmatmul.mubr.f32.gmra.mrb[0].mxu0 %v92
    %v160 = vpop.f32.mrb[0].mxu0
    %v161 = vadd.f32 %v88, %v160
    %v162 = vpop.f32.mrb[0].mxu0
    %163 = vdwg.mxu0
    %v164 = vld [vmem:[#allocation7] sm:$0xff]
    %v165 = vld [vmem:[#allocation7 + $0x8] sm:$0xff]
    %v166 = vld [vmem:[#allocation7 + $0x10] sm:$0xff]
    %v167 = vld [vmem:[#allocation7 + $0x18] sm:$0xff]
    %v168 = vld [vmem:[#allocation7 + $0x20] sm:$0xff]
    %v169 = vld [vmem:[#allocation7 + $0x28] sm:$0xff]
    %v170 = vld [vmem:[#allocation7 + $0x30] sm:$0xff]
    %v171 = vld [vmem:[#allocation7 + $0x38] sm:$0xff]
    %v172 = vld [vmem:[#allocation7 + $0x40] sm:$0xff]
    %v173 = vld [vmem:[#allocation7 + $0x48] sm:$0xff]
    %v174 = vld [vmem:[#allocation7 + $0x50] sm:$0xff]
    %v175 = vld [vmem:[#allocation7 + $0x58] sm:$0xff]
    %v176 = vld [vmem:[#allocation7 + $0x60] sm:$0xff]
    %v177 = vld [vmem:[#allocation7 + $0x68] sm:$0xff]
    %v178 = vld [vmem:[#allocation7 + $0x70] sm:$0xff]
    %v179 = vld [vmem:[#allocation7 + $0x78] sm:$0xff]
    %v180 = vld [vmem:[%s5] sm:$0x1]
    %v182 = vlaneseq
    %v183 = vshrl.u32 %v182, 7
    %v184 = vsub.s32 0, %v183
    %v185 = vrot.slane %v180, %v184
    %187 = vmatprep.subr.mxu0 0.0
    %188 = vmatpush1.msra.mxu0 %v164
    %189 = vmatprep.subr.mxu0 0.0
    %190 = vmatpush1.msra.mxu0 %v165
    %191 = vmatprep.subr.mxu0 0.0
    %192 = vmatpush1.msra.mxu0 %v166
    %193 = vmatprep.subr.mxu0 0.0
    %194 = vmatpush1.msra.mxu0 %v167
    %195 = vmatprep.subr.mxu0 0.0
    %196 = vmatpush1.msra.mxu0 %v168
    %197 = vmatprep.subr.mxu0 0.0
    %198 = vmatpush1.msra.mxu0 %v169
    %199 = vmatprep.subr.mxu0 0.0
    %200 = vmatpush1.msra.mxu0 %v170
    %201 = vmatprep.subr.mxu0 0.0
    %202 = vmatpush1.msra.mxu0 %v171
    %203 = vmatprep.subr.mxu0 0.0
    %204 = vmatpush1.msra.mxu0 %v172
    %205 = vmatprep.subr.mxu0 0.0
    %206 = vmatpush1.msra.mxu0 %v173
    %207 = vmatprep.subr.mxu0 0.0
    %208 = vmatpush1.msra.mxu0 %v174
    %209 = vmatprep.subr.mxu0 0.0
    %210 = vmatpush1.msra.mxu0 %v175
    %211 = vmatprep.subr.mxu0 0.0
    %212 = vmatpush1.msra.mxu0 %v176
    %213 = vmatprep.subr.mxu0 0.0
    %214 = vmatpush1.msra.mxu0 %v177
    %215 = vmatprep.subr.mxu0 0.0
    %216 = vmatpush1.msra.mxu0 %v178
    %217 = vmatprep.subr.mxu0 0.0
    %218 = vmatpush1.msra.mxu0 %v179
    %219 = vmatprep.subr.mxu0 0.0
    %220 = vmatpush1.msra.mxu0 0.0
    %221 = vmatprep.subr.mxu0 0.0
    %222 = vmatpush1.msra.mxu0 0.0
    %223 = vmatprep.subr.mxu0 0.0
    %224 = vmatpush1.msra.mxu0 0.0
    %225 = vmatprep.subr.mxu0 0.0
    %226 = vmatpush1.msra.mxu0 0.0
    %227 = vmatprep.subr.mxu0 0.0
    %228 = vmatpush1.msra.mxu0 0.0
    %229 = vmatprep.subr.mxu0 0.0
    %230 = vmatpush1.msra.mxu0 0.0
    %231 = vmatprep.subr.mxu0 0.0
    %232 = vmatpush1.msra.mxu0 0.0
    %233 = vmatprep.subr.mxu0 0.0
    %234 = vmatpush1.msra.mxu0 0.0
    %235 = vmatprep.subr.mxu0 0.0
    %236 = vmatpush1.msra.mxu0 0.0
    %237 = vmatprep.subr.mxu0 0.0
    %238 = vmatpush1.msra.mxu0 0.0
    %239 = vmatprep.subr.mxu0 0.0
    %240 = vmatpush1.msra.mxu0 0.0
    %241 = vmatprep.subr.mxu0 0.0
    %242 = vmatpush1.msra.mxu0 0.0
    %243 = vmatprep.subr.mxu0 0.0
    %244 = vmatpush1.msra.mxu0 0.0
    %245 = vmatprep.subr.mxu0 0.0
    %246 = vmatpush1.msra.mxu0 0.0
    %247 = vmatprep.subr.mxu0 0.0
    %248 = vmatpush1.msra.mxu0 0.0
    %249 = vmatprep.subr.mxu0 0.0
    %250 = vmatpush1.msra.mxu0 0.0
    %251 = vmatprep.mubr.f32.mxu0 0.0
    %252 = vmatmul.mubr.f32.gmra.mrb[0].mxu0 %v161
    %v253 = vpop.f32.mrb[0].mxu0
    %v254 = vadd.f32 %v185, %v253
    %v255 = vpop.f32.mrb[0].mxu0
    %256 = vdwg.mxu0
    %v257 = vld [vmem:[#allocation8] sm:$0xff]
    %v258 = vld [vmem:[#allocation8 + $0x8] sm:$0xff]
    %v259 = vld [vmem:[#allocation8 + $0x10] sm:$0xff]
    %v260 = vld [vmem:[#allocation8 + $0x18] sm:$0xff]
    %v261 = vld [vmem:[#allocation8 + $0x20] sm:$0xff]
    %v262 = vld [vmem:[#allocation8 + $0x28] sm:$0xff]
    %v263 = vld [vmem:[#allocation8 + $0x30] sm:$0xff]
    %v264 = vld [vmem:[#allocation8 + $0x38] sm:$0xff]
    %v265 = vld [vmem:[#allocation8 + $0x40] sm:$0xff]
    %v266 = vld [vmem:[#allocation8 + $0x48] sm:$0xff]
    %v267 = vld [vmem:[#allocation8 + $0x50] sm:$0xff]
    %v268 = vld [vmem:[#allocation8 + $0x58] sm:$0xff]
    %v269 = vld [vmem:[#allocation8 + $0x60] sm:$0xff]
    %v270 = vld [vmem:[#allocation8 + $0x68] sm:$0xff]
    %v271 = vld [vmem:[#allocation8 + $0x70] sm:$0xff]
    %v272 = vld [vmem:[#allocation8 + $0x78] sm:$0xff]
    %v273 = vld [vmem:[%s6] sm:$0x1]
    %v275 = vlaneseq
    %v276 = vshrl.u32 %v275, 7
    %v277 = vsub.s32 0, %v276
    %v278 = vrot.slane %v273, %v277
    %280 = vmatprep.subr.mxu0 0.0
    %281 = vmatpush1.msra.mxu0 %v257
    %282 = vmatprep.subr.mxu0 0.0
    %283 = vmatpush1.msra.mxu0 %v258
    %284 = vmatprep.subr.mxu0 0.0
    %285 = vmatpush1.msra.mxu0 %v259
    %286 = vmatprep.subr.mxu0 0.0
    %287 = vmatpush1.msra.mxu0 %v260
    %288 = vmatprep.subr.mxu0 0.0
    %289 = vmatpush1.msra.mxu0 %v261
    %290 = vmatprep.subr.mxu0 0.0
    %291 = vmatpush1.msra.mxu0 %v262
    %292 = vmatprep.subr.mxu0 0.0
    %293 = vmatpush1.msra.mxu0 %v263
    %294 = vmatprep.subr.mxu0 0.0
    %295 = vmatpush1.msra.mxu0 %v264
    %296 = vmatprep.subr.mxu0 0.0
    %297 = vmatpush1.msra.mxu0 %v265
    %298 = vmatprep.subr.mxu0 0.0
    %299 = vmatpush1.msra.mxu0 %v266
    %300 = vmatprep.subr.mxu0 0.0
    %301 = vmatpush1.msra.mxu0 %v267
    %302 = vmatprep.subr.mxu0 0.0
    %303 = vmatpush1.msra.mxu0 %v268
    %304 = vmatprep.subr.mxu0 0.0
    %305 = vmatpush1.msra.mxu0 %v269
    %306 = vmatprep.subr.mxu0 0.0
    %307 = vmatpush1.msra.mxu0 %v270
    %308 = vmatprep.subr.mxu0 0.0
    %309 = vmatpush1.msra.mxu0 %v271
    %310 = vmatprep.subr.mxu0 0.0
    %311 = vmatpush1.msra.mxu0 %v272
    %312 = vmatprep.subr.mxu0 0.0
    %313 = vmatpush1.msra.mxu0 0.0
    %314 = vmatprep.subr.mxu0 0.0
    %315 = vmatpush1.msra.mxu0 0.0
    %316 = vmatprep.subr.mxu0 0.0
    %317 = vmatpush1.msra.mxu0 0.0
    %318 = vmatprep.subr.mxu0 0.0
    %319 = vmatpush1.msra.mxu0 0.0
    %320 = vmatprep.subr.mxu0 0.0
    %321 = vmatpush1.msra.mxu0 0.0
    %322 = vmatprep.subr.mxu0 0.0
    %323 = vmatpush1.msra.mxu0 0.0
    %324 = vmatprep.subr.mxu0 0.0
    %325 = vmatpush1.msra.mxu0 0.0
    %326 = vmatprep.subr.mxu0 0.0
    %327 = vmatpush1.msra.mxu0 0.0
    %328 = vmatprep.subr.mxu0 0.0
    %329 = vmatpush1.msra.mxu0 0.0
    %330 = vmatprep.subr.mxu0 0.0
    %331 = vmatpush1.msra.mxu0 0.0
    %332 = vmatprep.subr.mxu0 0.0
    %333 = vmatpush1.msra.mxu0 0.0
    %334 = vmatprep.subr.mxu0 0.0
    %335 = vmatpush1.msra.mxu0 0.0
    %336 = vmatprep.subr.mxu0 0.0
    %337 = vmatpush1.msra.mxu0 0.0
    %338 = vmatprep.subr.mxu0 0.0
    %339 = vmatpush1.msra.mxu0 0.0
    %340 = vmatprep.subr.mxu0 0.0
    %341 = vmatpush1.msra.mxu0 0.0
    %342 = vmatprep.subr.mxu0 0.0
    %343 = vmatpush1.msra.mxu0 0.0
    %344 = vmatprep.mubr.f32.mxu0 0.0
    %345 = vmatmul.mubr.f32.gmra.mrb[0].mxu0 %v254
    %v346 = vpop.f32.mrb[0].mxu0
    %v347 = vadd.f32 %v278, %v346
    %v348 = vpop.f32.mrb[0].mxu0
    %349 = vdwg.mxu0
    %350 = vst [vmem:[#allocation10] sm:$0xff] %v347
    // Predicated region
    $region46: #{tpu_custom_call.1} parent=1 // pred_check
      _
    $region47: #{tpu_custom_call.1} parent=1 // pred_check_branch
      %352 = sbr.rel (0) target = $region49
    $region48: #{tpu_custom_call.1} parent=1 // pred_region
      %s354 = ssub.s32 128, 128
      %355 = vsyncadd [#allocation4], %s354
      %s357 = sshll.u32 [#allocation10], 4
      %s358 = int_to_ptr.vmem [resolvable:$true] %s357
      %360 = dma.vmem_to_hbm [thread:$0]  %s358, 128, %s7, [#allocation4]
    $region49: #{tpu_custom_call.1} parent=1 // pred_fallthru
      _
    // Predicated region
    $region50: #{tpu_custom_call.1} parent=1 // pred_check
      _
    $region51: #{tpu_custom_call.1} parent=1 // pred_check_branch
      %362 = sbr.rel (0) target = $region53
    $region52: #{tpu_custom_call.1} parent=1 // pred_region
      %363 = dma.done [#allocation4], 128
    $region53: #{tpu_custom_call.1} parent=1 // pred_fallthru
      _
    %364 = vsyncpa [#allocation3], 1
    %365 = vsyncpa [#allocation6], 1
    %366 = vsyncpa [#allocation9], 1
    %367 = vsyncpa [#allocation4], 1

</llo_original>
